<compile_context>
chip_gen: v7x
topology: tpu7x:2x2x1
jax: 0.10.0
libtpu: 0.0.40
codegen_flags: <defaults>
</compile_context>

<pallas_src>
import functools

import jax
import jax.numpy as jnp
from jax.experimental import pallas as pl
from jax.experimental.pallas import tpu as pltpu

_LANE = 128


def _round_up(x, m):
    return (x + m - 1) // m * m


def _vmem_capacity_bytes():
    try:
        return int(pltpu.get_tpu_info().vmem_capacity_bytes)
    except Exception:
        return 64 << 20  # conservative: v7x per-TensorCore VMEM


def _tile_prefs():
    cap = _vmem_capacity_bytes()
    # v5e/v6e (128 MiB VMEM) tolerate a deeper K tile; v7x (64 MiB) stays capped.
    tk_pref = 2048 if cap >= (100 << 20) else 1024
    return 512, 512, tk_pref


def _pick_tile(dim, pref, align):
    """Waste-aware tile: largest align-multiple <= pref minimizing padded extent."""
    dim_a = _round_up(max(dim, 1), align)
    if dim_a <= pref:
        return dim_a
    best_t, best_pad = align, float("inf")
    t = (pref // align) * align
    while t >= align:
        padded = _round_up(dim_a, t)
        if padded < best_pad:           # descending t => ties keep the larger tile
            best_pad, best_t = padded, t
        t -= align
    return best_t


def _linear_relu_fused_kernel(x_ref, w_ref, b_ref, o_ref, *, compute_dtype):
    """Single-K-block path: out = relu(x @ W + b), no accumulator scratch."""
    part = jnp.dot(x_ref[...].astype(compute_dtype), w_ref[...],
                   preferred_element_type=jnp.float32)
    o_ref[...] = jnp.maximum(part + b_ref[...], 0.0).astype(o_ref.dtype)


def _linear_relu_accum_kernel(x_ref, w_ref, b_ref, o_ref, acc_ref, *, compute_dtype):
    """Multi-K-block path: f32 accumulator, first partial written directly."""
    k = pl.program_id(2)
    part = jnp.dot(x_ref[...].astype(compute_dtype), w_ref[...],
                   preferred_element_type=jnp.float32)

    @pl.when(k == 0)
    def _():
        acc_ref[...] = part            # no zero-init + re-read on the first step

    @pl.when(k != 0)
    def _():
        acc_ref[...] += part

    @pl.when(k == pl.num_programs(2) - 1)
    def _():
        o_ref[...] = jnp.maximum(acc_ref[...] + b_ref[...], 0.0).astype(o_ref.dtype)


class PallasLinearReLU:
    """Pallas equivalent of LinearLayer inference forward: x.view(B,-1) -> Linear -> ReLU.

    Weight layout work (transpose to (D_in, D_out), pad to tile multiples, cast to
    the MXU compute dtype) happens once at construction, not per call.
    """

    def __init__(self, weight, bias=None, *, compute_dtype=jnp.bfloat16,
                 max_tn=None, max_tk=None):
        weight = jnp.asarray(weight, jnp.float32)
        self.d_out, self.d_in = weight.shape
        self.compute_dtype = compute_dtype

        tm_pref, tn_pref, tk_pref = _tile_prefs()
        if max_tn is not None:
            tn_pref = min(tn_pref, _round_up(max_tn, _LANE))
        if max_tk is not None:
            tk_pref = min(tk_pref, _round_up(max_tk, _LANE))
        self.tm_pref = tm_pref

        self.tn = _pick_tile(self.d_out, tn_pref, _LANE)
        self.tk = _pick_tile(self.d_in, tk_pref, _LANE)
        self.n_pad = _round_up(_round_up(self.d_out, _LANE), self.tn)
        self.k_pad = _round_up(_round_up(self.d_in, _LANE), self.tk)

        # Canonical (tm,tk) x (tk,tn) contraction: no per-tile transpose on the XLU.
        w_t = jnp.pad(weight.T,
                      ((0, self.k_pad - self.d_in), (0, self.n_pad - self.d_out)))
        self.w = w_t.astype(compute_dtype)

        if bias is None:
            b = jnp.zeros((self.d_out,), jnp.float32)
        else:
            b = jnp.asarray(bias, jnp.float32)
        self.b = jnp.pad(b, (0, self.n_pad - self.d_out)).reshape(1, self.n_pad)

    def __call__(self, x):
        x = jnp.asarray(x, jnp.float32)
        B = x.shape[0]
        x2 = x.reshape(B, -1)                      # x.view(x.shape[0], -1)
        assert x2.shape[1] == self.d_in

        x_sublane = 8                              # x stays f32 in HBM/VMEM
        tm = _pick_tile(B, self.tm_pref, x_sublane)
        m_pad = _round_up(_round_up(B, x_sublane), tm)

        tn, tk = self.tn, self.tk
        nm, nn = m_pad // tm, self.n_pad // tn
        nk = self.k_pad // tk

        # Guarantee >=2 blocks along a parallel axis so both v7x TensorCores work.
        if nm * nn == 1:
            if tn % (2 * _LANE) == 0:
                tn //= 2
            elif tm % (2 * x_sublane) == 0:
                tm //= 2
            nm, nn = m_pad // tm, self.n_pad // tn

        # Pad the activation only when there is an actual K / sublane remainder.
        if (m_pad, self.k_pad) != x2.shape:
            x2 = jnp.pad(x2, ((0, m_pad - B), (0, self.k_pad - self.d_in)))

        x_bytes = 4
        w_bytes = jnp.dtype(self.compute_dtype).itemsize
        vmem_need = (2 * (tm * tk * x_bytes + tk * tn * w_bytes + tn * 4 + tm * tn * 4)
                     + tm * tn * 4)
        vmem_limit = int(min(max(vmem_need * 3 // 2 + (4 << 20), 16 << 20), 96 << 20))

        cost = pl.CostEstimate(
            flops=2 * m_pad * self.k_pad * self.n_pad,
            transcendentals=0,
            bytes_accessed=(x_bytes * m_pad * self.k_pad * nn          # x re-streamed per N block
                            + w_bytes * self.k_pad * self.n_pad * nm   # W re-streamed per M block
                            + 4 * self.n_pad
                            + 4 * m_pad * self.n_pad),
        )

        if nk == 1:
            kernel = functools.partial(_linear_relu_fused_kernel,
                                       compute_dtype=self.compute_dtype)
            grid = (nm, nn)
            in_specs = [
                pl.BlockSpec((tm, tk), lambda i, j: (i, 0)),
                pl.BlockSpec((tk, tn), lambda i, j: (0, j)),
                pl.BlockSpec((1, tn), lambda i, j: (0, j)),
            ]
            out_specs = pl.BlockSpec((tm, tn), lambda i, j: (i, j))
            scratch_shapes = []
            dim_sem = ("parallel", "parallel")
        else:
            kernel = functools.partial(_linear_relu_accum_kernel,
                                       compute_dtype=self.compute_dtype)
            grid = (nm, nn, nk)                     # reduction axis last
            in_specs = [
                pl.BlockSpec((tm, tk), lambda i, j, k: (i, k)),
                pl.BlockSpec((tk, tn), lambda i, j, k: (k, j)),
                pl.BlockSpec((1, tn), lambda i, j, k: (0, j)),
            ]
            out_specs = pl.BlockSpec((tm, tn), lambda i, j, k: (i, j))
            scratch_shapes = [pltpu.VMEM((tm, tn), jnp.float32)]
            dim_sem = ("parallel", "parallel", "arbitrary")

        out_p = pl.pallas_call(
            kernel,
            out_shape=jax.ShapeDtypeStruct((m_pad, self.n_pad), jnp.float32),
            grid_spec=pltpu.PrefetchScalarGridSpec(
                num_scalar_prefetch=0,
                grid=grid,
                in_specs=in_specs,
                out_specs=out_specs,
                scratch_shapes=scratch_shapes,
            ),
            compiler_params=pltpu.CompilerParams(
                dimension_semantics=dim_sem,
                vmem_limit_bytes=vmem_limit,
            ),
            cost_estimate=cost,
        )(x2, self.w, self.b)

        if m_pad == B and self.n_pad == self.d_out:
            return out_p                            # no padding: skip the slice pass
        return out_p[:B, :self.d_out]


if __name__ == "__main__":
    key = jax.random.PRNGKey(0)
    kx, kw, kb, kx2, kw2 = jax.random.split(key, 5)

    # Test 1: small 3-D input (exercises the x.view(B,-1) flatten) — single-K fused kernel.
    B, F0, F1, D_out = 8, 4, 8, 64
    D_in = F0 * F1
    x = jax.random.normal(kx, (B, F0, F1), dtype=jnp.float32)
    weight = jax.random.normal(kw, (D_out, D_in), dtype=jnp.float32) / jnp.sqrt(D_in)
    bias = jax.random.normal(kb, (D_out,), dtype=jnp.float32) * 0.01

    layer = PallasLinearReLU(weight, bias)
    out = jax.block_until_ready(layer(x))
    ref = jnp.maximum(x.reshape(B, -1) @ weight.T + bias, 0.0)
    assert out.shape == (B, D_out)
    assert jnp.allclose(out, ref, atol=2e-2, rtol=2e-2)   # bf16 operands, f32 accumulate

    # Test 2: force a multi-K grid (max_tk=128) — exercises the accumulator kernel.
    B2, D_in2, D_out2 = 16, 256, 128
    x2 = jax.random.normal(kx2, (B2, D_in2), dtype=jnp.float32)
    w2 = jax.random.normal(kw2, (D_out2, D_in2), dtype=jnp.float32) / jnp.sqrt(D_in2)
    layer2 = PallasLinearReLU(w2, None, max_tk=128)
    out2 = jax.block_until_ready(layer2(x2))
    ref2 = jnp.maximum(x2 @ w2.T, 0.0)
    assert out2.shape == (B2, D_out2)
    assert jnp.allclose(out2, ref2, atol=2e-2, rtol=2e-2)

    print("KERNEL_OK")
</pallas_src>

<mosaic_0001>
module attributes {stable_mosaic.version = 11 : i64} {
  func.func @_linear_relu_fused_kernel(%arg0: i32, %arg1: i32, %arg2: memref<8x128xf32, #tpu.memory_space<vmem>>, %arg3: memref<128x128xbf16, #tpu.memory_space<vmem>>, %arg4: memref<1x128xf32, #tpu.memory_space<vmem>>, %arg5: memref<8x128xf32, #tpu.memory_space<vmem>>) attributes {dimension_semantics = [#tpu.dimension_semantics<parallel>, #tpu.dimension_semantics<parallel>], iteration_bounds = array<i64: 1, 1>, scalar_prefetch = 0 : i64, scratch_operands = 0 : i64, tpu.core_type = #tpu.core_type<tc>, window_params = [{transform_indices = @transform_0, window_bounds = array<i64: 8, 128>}, {transform_indices = @transform_1, window_bounds = array<i64: 128, 128>}, {transform_indices = @transform_2, window_bounds = array<i64: 1, 128>}, {transform_indices = @transform_3, window_bounds = array<i64: 8, 128>}]} {
    %c0 = arith.constant 0 : index
    %c0_0 = arith.constant 0 : index
    %0 = vector.load %arg2[%c0, %c0_0] : memref<8x128xf32, #tpu.memory_space<vmem>>, vector<8x128xf32>
    %1 = arith.truncf %0 : vector<8x128xf32> to vector<8x128xbf16>
    %c0_1 = arith.constant 0 : index
    %c0_2 = arith.constant 0 : index
    %2 = vector.load %arg3[%c0_1, %c0_2] : memref<128x128xbf16, #tpu.memory_space<vmem>>, vector<128x128xbf16>
    %cst = arith.constant dense<0.000000e+00> : vector<8x128xf32>
    %3 = tpu.matmul %1, %2, %cst {dimension_numbers = #tpu.dot_dimension_numbers<[1], [0], [0], [1], [0, 0, 1, 1], [], []>} : vector<8x128xbf16>, vector<128x128xbf16>, vector<8x128xf32> -> vector<8x128xf32>
    %c0_3 = arith.constant 0 : index
    %c0_4 = arith.constant 0 : index
    %4 = vector.load %arg4[%c0_3, %c0_4] : memref<1x128xf32, #tpu.memory_space<vmem>>, vector<1x128xf32>
    %5 = vector.broadcast %4 : vector<1x128xf32> to vector<8x128xf32>
    %6 = arith.addf %3, %5 : vector<8x128xf32>
    %cst_5 = arith.constant 0.000000e+00 : f32
    %7 = vector.broadcast %cst_5 : f32 to vector<8x128xf32>
    %8 = arith.maximumf %6, %7 : vector<8x128xf32>
    %c0_6 = arith.constant 0 : index
    %c0_7 = arith.constant 0 : index
    %9 = vector.load %arg5[%c0_6, %c0_7] : memref<8x128xf32, #tpu.memory_space<vmem>>, vector<8x128xf32>
    tpu.vector_store %arg5[%c0_6, %c0_7], %8 {strides = array<i32>} : memref<8x128xf32, #tpu.memory_space<vmem>>, vector<8x128xf32>,
    return
  }
  func.func @transform_0(%arg0: i32, %arg1: i32) -> (i32, i32) {
    %c0_i32 = arith.constant 0 : i32
    %c0_i32_0 = arith.constant 0 : i32
    return %arg0, %c0_i32 : i32, i32
  }
  func.func @transform_1(%arg0: i32, %arg1: i32) -> (i32, i32) {
    %c0_i32 = arith.constant 0 : i32
    %c0_i32_0 = arith.constant 0 : i32
    return %c0_i32, %arg1 : i32, i32
  }
  func.func @transform_2(%arg0: i32, %arg1: i32) -> (i32, i32) {
    %c0_i32 = arith.constant 0 : i32
    %c0_i32_0 = arith.constant 0 : i32
    return %c0_i32, %arg1 : i32, i32
  }
  func.func @transform_3(%arg0: i32, %arg1: i32) -> (i32, i32) {
    %c0_i32 = arith.constant 0 : i32
    return %arg0, %arg1 : i32, i32
  }
}

</mosaic_0001>

<llo_original>
// kernel: tpu_custom_call.1
$region0: #{tpu_custom_call.1}
  #allocation0 [shape = 'u32[]', space=smem, size = 0x4, offset = 0x4, fixed_abs, tag = 'smem constant byte address 0x4 - core index']
  #allocation1 [shape = 'u32[144,128]{1,0:T(1,128)}', space=vmem, size = 0x12000, scoped, tag = 'internal scratch']
  %s0 = inlined_call_operand.hbm [shape: f32[8,128], index: 0, kind: input, shape index: {}]
  %s1 = inlined_call_operand.hbm [shape: bf16[128,128], index: 1, kind: input, shape index: {}]
  %s2 = inlined_call_operand.vmem [shape: f32[1,128], index: 2, kind: input, shape index: {}]
  %s3 = inlined_call_operand.hbm [shape: f32[8,128], index: 3, kind: output, shape index: {}]
  %s4 = sld [smem:[#allocation0]]
  $region30: #{tpu_custom_call.1} parent=0
    _
  %s6 = ssub.s32 1, %s4
  %s7 = scalar_select 0, %s6, %s4
  $region1: #{tpu_custom_call.1} parent=0
    #allocation2 [shape = 'u8[4096]{0}', space=vmem, size = 0x1000, scoped, tag = 'input window, operand 0, single buffered']
    #allocation3 [shape = 's32[1]{0}', space=sflag, size = 0x4, scoped, tag = 'scoped memory for tpu_custom_call.1']
    #allocation4 [shape = 's32[1]{0}', space=sflag, size = 0x4, scoped, tag = 'scoped memory for tpu_custom_call.1']
    #allocation5 [shape = 'u8[32768]{0}', space=vmem, size = 0x8000, scoped, tag = 'input window, operand 1, single buffered']
    #allocation6 [shape = 's32[1]{0}', space=sflag, size = 0x4, scoped, tag = 'scoped memory for tpu_custom_call.1']
    #allocation7 [shape = 'u8[4096]{0}', space=vmem, size = 0x1000, scoped, tag = 'output window, operand 0, single buffered']
    %8 = vsyncpa [#allocation3], 0
    %9 = vsyncpa [#allocation6], 0
    %10 = vsyncpa [#allocation4], 0
    // Predicated region
    $region2: #{tpu_custom_call.1} parent=1 // pred_check
      _
    $region3: #{tpu_custom_call.1} parent=1 // pred_check_branch
      %12 = sbr.rel (0) target = $region5
    $region4: #{tpu_custom_call.1} parent=1 // pred_region
      %s14 = ssub.s32 128, 128
      %15 = vsyncadd [#allocation3], %s14
      %s17 = sshll.u32 [#allocation2], 4
      %s18 = int_to_ptr.vmem [resolvable:$true] %s17
      %20 = dma.hbm_to_vmem [thread:$0]  %s0, 128, %s18, [#allocation3]
    $region5: #{tpu_custom_call.1} parent=1 // pred_fallthru
      _
    // Predicated region
    $region6: #{tpu_custom_call.1} parent=1 // pred_check
      _
    $region7: #{tpu_custom_call.1} parent=1 // pred_check_branch
      %22 = sbr.rel (0) target = $region9
    $region8: #{tpu_custom_call.1} parent=1 // pred_region
      %s24 = ssub.s32 1024, 1024
      %25 = vsyncadd [#allocation6], %s24
      %s26 = sshll.u32 [#allocation5], 4
      %s27 = int_to_ptr.vmem [resolvable:$true] %s26
      %32 = dma.hbm_to_vmem [thread:$0]  %s1, 1024, %s27, [#allocation6], 64, 64, 4
    $region9: #{tpu_custom_call.1} parent=1 // pred_fallthru
      _
    // Predicated region
    $region10: #{tpu_custom_call.1} parent=1 // pred_check
      _
    $region11: #{tpu_custom_call.1} parent=1 // pred_check_branch
      %34 = sbr.rel (0) target = $region13
    $region12: #{tpu_custom_call.1} parent=1 // pred_region
      _
    $region13: #{tpu_custom_call.1} parent=1 // pred_fallthru
      _
    // Predicated region
    $region14: #{tpu_custom_call.1} parent=1 // pred_check
      _
    $region15: #{tpu_custom_call.1} parent=1 // pred_check_branch
      %36 = sbr.rel (0) target = $region17
    $region16: #{tpu_custom_call.1} parent=1 // pred_region
      %37 = dma.done [#allocation3], 128
    $region17: #{tpu_custom_call.1} parent=1 // pred_fallthru
      _
    // Predicated region
    $region18: #{tpu_custom_call.1} parent=1 // pred_check
      _
    $region19: #{tpu_custom_call.1} parent=1 // pred_check_branch
      %39 = sbr.rel (0) target = $region21
    $region20: #{tpu_custom_call.1} parent=1 // pred_region
      %40 = dma.done [#allocation6], 1024
    $region21: #{tpu_custom_call.1} parent=1 // pred_fallthru
      _
    %v42 = vld [vmem:[#allocation2] sm:$0xff]
    %v43 = vpack.c.bf16 %v42, %v42
    %v44 = vld [vmem:[#allocation5] sm:$0xf]
    %v45 = vld [vmem:[#allocation5 + $0x4] sm:$0xf]
    %v46 = vld [vmem:[#allocation5 + $0x8] sm:$0xf]
    %v47 = vld [vmem:[#allocation5 + $0xc] sm:$0xf]
    %v48 = vld [vmem:[#allocation5 + $0x10] sm:$0xf]
    %v49 = vld [vmem:[#allocation5 + $0x14] sm:$0xf]
    %v50 = vld [vmem:[#allocation5 + $0x18] sm:$0xf]
    %v51 = vld [vmem:[#allocation5 + $0x1c] sm:$0xf]
    %v52 = vld [vmem:[#allocation5 + $0x20] sm:$0xf]
    %v53 = vld [vmem:[#allocation5 + $0x24] sm:$0xf]
    %v54 = vld [vmem:[#allocation5 + $0x28] sm:$0xf]
    %v55 = vld [vmem:[#allocation5 + $0x2c] sm:$0xf]
    %v56 = vld [vmem:[#allocation5 + $0x30] sm:$0xf]
    %v57 = vld [vmem:[#allocation5 + $0x34] sm:$0xf]
    %v58 = vld [vmem:[#allocation5 + $0x38] sm:$0xf]
    %v59 = vld [vmem:[#allocation5 + $0x3c] sm:$0xf]
    %v60 = vld [vmem:[%s2] sm:$0x1]
    %v62 = vlaneseq
    %v63 = vshrl.u32 %v62, 7
    %v64 = vsub.s32 0, %v63
    %v65 = vrot.slane %v60, %v64
    %v83 = vunpack.c.l.b16 %v44
    %v84 = vunpack.c.l.b16 %v45
    %v85 = vunpack.c.l.b16 %v46
    %v86 = vunpack.c.l.b16 %v47
    %v87 = vunpack.c.l.b16 %v48
    %v88 = vunpack.c.l.b16 %v49
    %v89 = vunpack.c.l.b16 %v50
    %v90 = vunpack.c.l.b16 %v51
    %v91 = vunpack.c.l.b16 %v52
    %v92 = vunpack.c.l.b16 %v53
    %v93 = vunpack.c.l.b16 %v54
    %v94 = vunpack.c.l.b16 %v55
    %v95 = vunpack.c.l.b16 %v56
    %v96 = vunpack.c.l.b16 %v57
    %v97 = vunpack.c.l.b16 %v58
    %v98 = vunpack.c.l.b16 %v59
    %v99 = vpack.c.b16 %v84, %v83
    %v100 = vpack.c.b16 %v86, %v85
    %v101 = vpack.c.b16 %v88, %v87
    %v102 = vpack.c.b16 %v90, %v89
    %v103 = vpack.c.b16 %v92, %v91
    %v104 = vpack.c.b16 %v94, %v93
    %v105 = vpack.c.b16 %v96, %v95
    %v106 = vpack.c.b16 %v98, %v97
    %115 = vmatprep.subr.bf16.mxu0 0
    %116 = vmatpush1.bf16.msra.mxu0 %v99
    %117 = vmatprep.subr.bf16.mxu0 0
    %118 = vmatpush1.bf16.msra.mxu0 %v100
    %119 = vmatprep.subr.bf16.mxu0 0
    %120 = vmatpush1.bf16.msra.mxu0 %v101
    %121 = vmatprep.subr.bf16.mxu0 0
    %122 = vmatpush1.bf16.msra.mxu0 %v102
    %123 = vmatprep.subr.bf16.mxu0 0
    %124 = vmatpush1.bf16.msra.mxu0 %v103
    %125 = vmatprep.subr.bf16.mxu0 0
    %126 = vmatpush1.bf16.msra.mxu0 %v104
    %127 = vmatprep.subr.bf16.mxu0 0
    %128 = vmatpush1.bf16.msra.mxu0 %v105
    %129 = vmatprep.subr.bf16.mxu0 0
    %130 = vmatpush1.bf16.msra.mxu0 %v106
    %131 = vmatprep.subr.bf16.mxu0 0
    %132 = vmatpush1.bf16.msra.mxu0 0
    %133 = vmatprep.subr.bf16.mxu0 0
    %134 = vmatpush1.bf16.msra.mxu0 0
    %135 = vmatprep.subr.bf16.mxu0 0
    %136 = vmatpush1.bf16.msra.mxu0 0
    %137 = vmatprep.subr.bf16.mxu0 0
    %138 = vmatpush1.bf16.msra.mxu0 0
    %139 = vmatprep.subr.bf16.mxu0 0
    %140 = vmatpush1.bf16.msra.mxu0 0
    %141 = vmatprep.subr.bf16.mxu0 0
    %142 = vmatpush1.bf16.msra.mxu0 0
    %143 = vmatprep.subr.bf16.mxu0 0
    %144 = vmatpush1.bf16.msra.mxu0 0
    %145 = vmatprep.subr.bf16.mxu0 0
    %146 = vmatpush1.bf16.msra.mxu0 0
    %147 = vmatprep.mubr.bf16.mxu0 0
    %148 = vmatmul.mubr.bf16.gmra.mrb[0].mxu0 %v43
    %v149 = vpop.f32.mrb[0].mxu0
    %v150 = vadd.f32 %v65, %v149
    %v151 = vpop.f32.mrb[0].mxu0
    %v152 = vpop.f32.mrb[0].mxu0
    %v153 = vpop.f32.mrb[0].mxu0
    %154 = vdwg.mxu0
    %v155 = vmax.f32 %v150, 0.0
    %156 = vst [vmem:[#allocation7] sm:$0xff] %v155
    // Predicated region
    $region22: #{tpu_custom_call.1} parent=1 // pred_check
      _
    $region23: #{tpu_custom_call.1} parent=1 // pred_check_branch
      %158 = sbr.rel (0) target = $region25
    $region24: #{tpu_custom_call.1} parent=1 // pred_region
      %s160 = ssub.s32 128, 128
      %161 = vsyncadd [#allocation4], %s160
      %s163 = sshll.u32 [#allocation7], 4
      %s164 = int_to_ptr.vmem [resolvable:$true] %s163
      %166 = dma.vmem_to_hbm [thread:$0]  %s164, 128, %s3, [#allocation4]
    $region25: #{tpu_custom_call.1} parent=1 // pred_fallthru
      _
    // Predicated region
    $region26: #{tpu_custom_call.1} parent=1 // pred_check
      _
    $region27: #{tpu_custom_call.1} parent=1 // pred_check_branch
      %168 = sbr.rel (0) target = $region29
    $region28: #{tpu_custom_call.1} parent=1 // pred_region
      %169 = dma.done [#allocation4], 128
    $region29: #{tpu_custom_call.1} parent=1 // pred_fallthru
      _
    %170 = vsyncpa [#allocation3], 1
    %171 = vsyncpa [#allocation6], 1
    %172 = vsyncpa [#allocation4], 1

</llo_original>
